<compile_context>
chip_gen: v6e
topology: v6e:2x2x1
jax: 0.10.0
libtpu: 0.0.40
codegen_flags: <defaults>
</compile_context>

<pallas_src>
from abc import ABCMeta, abstractmethod
from copy import deepcopy

import jax
import jax.numpy as jnp
from jax.experimental import pallas as pl
from jax.experimental.pallas import tpu as pltpu


_LANE = 128
_MAX_LANES = 32768  # cap on lane width of the 2-D lane-dense view


def _cdiv(a, b):
    return -(-a // b)


def _round_up(a, b):
    return _cdiv(a, b) * b


def _sublane_multiple(dtype):
    # f32 -> 8, bf16 -> 16, int8/fp8 -> 32 (packed-sublane tiling).
    return max(8, 32 // jnp.dtype(dtype).itemsize)


def _tpu_profile():
    """Generation-aware sizing: (per-block byte cap, vmem_limit_bytes, n_tensorcores)."""
    vmem = None
    try:
        info = pltpu.get_tpu_info()
        vmem = int(getattr(info, "vmem_capacity_bytes", 0)) or None
    except Exception:  # no TPU info available -> conservative (v7x-sized) defaults
        vmem = None
    if vmem is None:
        vmem = 64 << 20
    if vmem <= (64 << 20):
        # v7x-class: 64 MiB VMEM per TC, 2 TensorCores/chip.
        #   smaller blocks, tight vmem limit (identity only needs ~4 live blocks),
        #   and the grid is split so both TCs get balanced halves.
        return 6 << 20, 40 << 20, 2
    # v5e / v6e: 128 MiB VMEM, single TensorCore -> bigger blocks, fewer grid
    # steps (amortize ~0.35 us/step), roomier vmem limit.
    return 14 << 20, 96 << 20, 1


def _choose_view(padded_total, dtype, block_bytes_cap, n_tc):
    """Pick a lane-dense (rows, lanes) view with full-sublane rows and a tile height."""
    sub = _sublane_multiple(dtype)
    itemsize = jnp.dtype(dtype).itemsize

    # Largest multiple-of-128 lane width that still leaves rows >= sub and a
    # multiple of sub (full-sublane vregs / VMEM tiles, unmasked vst).
    # lanes = 128 always qualifies because padded_total % (sub * 128) == 0.
    lanes = _LANE
    cand = (min(_MAX_LANES, padded_total // sub) // _LANE) * _LANE
    for c in range(cand, _LANE - 1, -_LANE):
        if padded_total % c == 0 and (padded_total // c) % sub == 0:
            lanes = c
            break
    rows = padded_total // lanes

    # Tile height: as many rows as fit the per-block VMEM budget, sublane-aligned.
    max_rows = max(sub, (block_bytes_cap // (lanes * itemsize)) // sub * sub)
    tile_rows = max(sub, (min(rows, max_rows) // sub) * sub)

    # Only split the grid on multi-TensorCore chips (v7x); on v5e/v6e the grid
    # is a sequential loop, so splitting only adds per-step pipeline overhead.
    if n_tc >= 2 and rows >= 2 * sub:
        steps = _cdiv(rows, tile_rows)
        if steps == 1:
            tile_rows = _round_up(_cdiv(rows, 2), sub)           # two balanced halves
        elif steps % 2 == 1:
            tile_rows = max(sub, _round_up(_cdiv(rows, steps + 1), sub))  # even step count

    return rows, lanes, tile_rows


# ----------------------------------------------------------------------------
# Kernels
# ----------------------------------------------------------------------------

def _copy_kernel(x_ref, o_ref):
    # Skeleton body a real subclass would replace with per-block compute;
    # for the abstract base the only defined semantics is pass-through.
    o_ref[...] = x_ref[...]


def _hbm_copy_kernel(x_hbm, o_hbm, sem):
    # Direct HBM->HBM DMA: no VMEM staging, no vld/vst slot usage.
    cp = pltpu.make_async_copy(x_hbm, o_hbm, sem)
    cp.start()
    cp.wait()


def pallas_hbm_copy(x):
    """Materialized identity copy as a single HBM->HBM DMA (no VMEM round trip)."""
    return pl.pallas_call(
        _hbm_copy_kernel,
        out_shape=jax.ShapeDtypeStruct(x.shape, x.dtype),
        in_specs=[pl.BlockSpec(memory_space=pl.ANY)],
        out_specs=pl.BlockSpec(memory_space=pl.ANY),
        scratch_shapes=[pltpu.SemaphoreType.DMA],
    )(x)


def pallas_tiled_identity(x, *, alias_input=False):
    """Lane-dense, tiled VMEM pass-through.

    This is the skeleton a subclass with real per-block compute should start
    from.  `alias_input` is OPT-IN and only safe when each output block depends
    solely on its own (same-index) input block.
    """
    block_cap, vmem_limit, n_tc = _tpu_profile()
    total = int(x.size)
    sub = _sublane_multiple(x.dtype)
    pad_to = sub * _LANE
    padded_total = _round_up(total, pad_to)

    flat = x.reshape(-1)
    # TODO(synk): confirm in xprof that this flatten/pad does not introduce a
    # hidden relayout copy for awkward NCHW shapes; if it does, tile the
    # natural 4-D shape with a full-last-two-dims BlockSpec instead.
    if padded_total != total:
        flat = jnp.pad(flat, (0, padded_total - total))

    rows, lanes, tile_rows = _choose_view(padded_total, x.dtype, block_cap, n_tc)
    x2d = flat.reshape(rows, lanes)

    y2d = pl.pallas_call(
        _copy_kernel,
        out_shape=jax.ShapeDtypeStruct((rows, lanes), x.dtype),
        grid=(_cdiv(rows, tile_rows),),
        in_specs=[pl.BlockSpec((tile_rows, lanes), lambda i: (i, 0))],
        out_specs=pl.BlockSpec((tile_rows, lanes), lambda i: (i, 0)),
        input_output_aliases={0: 0} if alias_input else {},
        compiler_params=pltpu.CompilerParams(
            # "parallel" only pays off on v7x (2 TCs) and only once a subclass
            # is compute-bound; for the mem-bound copy it is neutral.
            dimension_semantics=("parallel",),
            vmem_limit_bytes=vmem_limit,
        ),
    )(x2d)

    y = y2d.reshape(-1)
    if padded_total != total:
        y = y[:total]
    return y.reshape(x.shape)


# ----------------------------------------------------------------------------
# Module mirror
# ----------------------------------------------------------------------------

class BaseModule(metaclass=ABCMeta):
    """JAX/Pallas mirror of the PyTorch BaseModule (abstract)."""

    def __init__(self, config):
        self.config = deepcopy(config)

    @abstractmethod
    def forward(self, x):
        raise NotImplementedError(
            "somthing important called forward pass has been excluded!"
        )

    def __call__(self, *args, **kwargs):
        return self.forward(*args, **kwargs)


class IdentityModule(BaseModule):
    """Minimal concrete subclass: the abstract base defines no transformation,
    so forward is the identity.

    Default path short-circuits (returns x) — zero HBM traffic.  Passing
    materialize=True forces a fresh output buffer via a direct HBM->HBM DMA.
    `pallas_tiled_identity` remains available as the tiled-compute skeleton
    for real subclasses.
    """

    def forward(self, x, *, materialize=False):
        if not materialize:
            return x            # true identity: skip the kernel entirely
        return pallas_hbm_copy(x)


if __name__ == "__main__":
    key = jax.random.PRNGKey(0)
    x = jax.random.normal(key, (2, 4, 16, 16), dtype=jnp.float32)  # NCHW
    x_snapshot = jax.device_get(x)  # independent host copy for correctness checks

    module = IdentityModule(config={"name": "base", "channels": 4})

    # 1) Default forward: short-circuited identity (no kernel launch, no traffic).
    y_fast = module(x)

    # 2) Materialized identity: single HBM->HBM DMA (no VMEM staging).
    y_dma = module(x, materialize=True)

    # 3) Tiled, lane-dense VMEM skeleton (what a real subclass would extend).
    y_tiled = pallas_tiled_identity(x)

    jax.block_until_ready((y_fast, y_dma, y_tiled))

    assert y_fast.shape == x.shape and y_fast.dtype == x.dtype
    assert y_dma.shape == x.shape and y_dma.dtype == x.dtype
    assert y_tiled.shape == x.shape and y_tiled.dtype == x.dtype
    # Compare against the independent host snapshot (not x itself), so any
    # in-place / aliasing bug would be caught.
    assert bool(jnp.allclose(y_fast, x_snapshot))
    assert bool(jnp.allclose(y_dma, x_snapshot))
    assert bool(jnp.allclose(y_tiled, x_snapshot))

    print("KERNEL_OK")
</pallas_src>

<mosaic_0001>
module attributes {stable_mosaic.version = 11 : i64} {
  func.func @_hbm_copy_kernel(%arg0: memref<2x4x16x16xf32, #tpu.memory_space<any>>, %arg1: memref<2x4x16x16xf32, #tpu.memory_space<any>>, %arg2: memref<!tpu.dma_semaphore, #tpu.memory_space<semaphore_mem>>) attributes {dimension_semantics = [], scalar_prefetch = 0 : i64, scratch_operands = 1 : i64, tpu.core_type = #tpu.core_type<tc>} {
    tpu.enqueue_dma source(%arg0 : memref<2x4x16x16xf32, #tpu.memory_space<any>>) target(%arg1 : memref<2x4x16x16xf32, #tpu.memory_space<any>>) target_semaphore(%arg2 : memref<!tpu.dma_semaphore, #tpu.memory_space<semaphore_mem>>)
    tpu.wait_dma2 semaphore(%arg2 : memref<!tpu.dma_semaphore, #tpu.memory_space<semaphore_mem>>) src(%arg0 : memref<2x4x16x16xf32, #tpu.memory_space<any>>) dst(%arg1 : memref<2x4x16x16xf32, #tpu.memory_space<any>>)
    return
  }
}

</mosaic_0001>

<llo_original>
// kernel: tpu_custom_call.1
$region0: #{tpu_custom_call.1}
  #allocation0 [shape = 'u32[]', space=smem, size = 0x4, offset = 0x4, fixed_abs, tag = 'smem constant byte address 0x4 - core index']
  #allocation1 [shape = 'u32[144,128]{1,0:T(1,128)}', space=vmem, size = 0x12000, scoped, tag = 'internal scratch']
  #allocation2 [shape = 's32[1]{0}', space=sflag, size = 0x4, scoped, tag = 'scratch operand']
  #allocation3 [shape = 's32[]', space=sflag, size = 0x4, offset = 0, fixed_abs, tag = 'sflag constant byte address 0x0 - dummy sync flag']
  #allocation4 [shape = 'u32[0]{0}', space=smem, size = 0, offset = 0, fixed_abs, tag = 'smem constant byte address 0x0 - null']
  %s0 = inlined_call_operand.hbm [shape: f32[2,4,16,16], index: 0, kind: input, shape index: {}]
  %s1 = inlined_call_operand.hbm [shape: f32[2,4,16,16], index: 1, kind: output, shape index: {}]
  %s2 = sld [smem:[#allocation0]]
  $region2: #{tpu_custom_call.1} parent=0
    _
  %s4 = ssub.s32 1, %s2
  %s5 = scalar_select 0, %s4, %s2
  %s7 = sshll.u32 1, 14
  %s8 = sxor.u32 4294967295, %s7
  %12 = dma.general %s0, 2048, %s1, [#allocation2], 131072, [#allocation4], 0, 0
  %s13 = smul.u32 2, 4
  %s14 = smul.u32 %s13, 16
  %s15 = smul.u32 %s14, 1
  %s16 = sshll.u32 %s15, 4
  %17 = dma.done [#allocation2], %s16
  %18 = vsyncmov [#allocation2]
  %s19 = vpop.sfrf %18
  %p20 = scmp.eq.s32.totalorder %s19, 0
  %p21 = pneg %p20
  %23 = shalt.err (%p21)

</llo_original>
